<compile_context>
chip_gen: v7x
topology: tpu7x:2x2x1
jax: 0.10.0
libtpu: 0.0.40
codegen_flags: <defaults>
</compile_context>

<pallas_src>
import jax
import jax.numpy as jnp
from jax.experimental import pallas as pl
from jax.experimental.pallas import tpu as pltpu


def _conv1x1_kernel(x_ref, w_ref, b_ref, o_ref):
    # x_ref: (3, ...) VMEM tile; w_ref: (3,) f32 SMEM; b_ref: (1,) f32 SMEM;
    # o_ref: output VMEM tile (output-channel dim squeezed away).
    # Accumulate in f32 (free VALU slack in a mem-bound kernel), cast at store.
    x = x_ref[...].astype(jnp.float32)
    acc = w_ref[0] * x[0] + w_ref[1] * x[1] + w_ref[2] * x[2] + b_ref[0]
    o_ref[...] = acc.reshape(o_ref.shape).astype(o_ref.dtype)


def _round_up(v, m):
    return -(-v // m) * m


def _vmem_limit_bytes():
    # Generation-aware scoped-VMEM limit: ~3/4 of physical VMEM, capped at 96 MiB.
    # v7x (64 MiB)  -> 48 MiB;  v5e / v6e (128 MiB) -> 96 MiB.
    try:
        cap = pltpu.get_tpu_info().vmem_capacity_bytes
    except Exception:
        cap = 64 * 1024 * 1024
    return min(cap * 3 // 4, 96 * 1024 * 1024)


def qrc_unet_forward(x_nchw, weight, bias, *, block_elems=None):
    """QRC_UNet forward = nn.Conv2d(3, 1, kernel_size=1).

    x_nchw: (N, 3, H, W); weight: (1, 3, 1, 1); bias: (1,). Returns (N, 1, H, W).
    """
    N, C, H, W = x_nchw.shape
    assert C == 3
    spatial = H * W
    itemsize = jnp.dtype(x_nchw.dtype).itemsize
    # Sublane packing for the dtype: 8 (f32) / 16 (bf16) / 32 (int8, fp8).
    pack = max(8, 32 // itemsize)
    if block_elems is None:
        # ~4 MiB of output per step (f32: 1M spatial elems; bf16: 2M) ->
        # ~16 MiB useful HBM traffic / step, ~32 MiB VMEM double-buffered.
        block_elems = (4 * 1024 * 1024) // itemsize

    w_vec = weight.reshape(C).astype(jnp.float32)   # (3,) f32 -> SMEM
    b_vec = bias.reshape(1).astype(jnp.float32)     # (1,) f32 -> SMEM

    # Guarantee enough total grid steps (>= ~4) so v7x's two TensorCores both
    # get work and DMA/compute stay overlapped, even for small inputs.
    min_steps = max(1, -(-4 // N))

    compiler_params = pltpu.CompilerParams(
        dimension_semantics=("parallel", "parallel"),
        vmem_limit_bytes=_vmem_limit_bytes(),
    )

    x3 = x_nchw.reshape(N, C, spatial)  # free reshape: spatial stays minor axis

    lane = next((l for l in (1024, 512, 256, 128) if spatial % l == 0), None)

    if lane is not None:
        # ---- Dense path: (N, C, srows, lane), lane- and sublane-dense tiles.
        srows = spatial // lane
        x4 = x3.reshape(N, C, srows, lane)           # free reshape
        target_rows = max(pack, (block_elems // lane) // pack * pack)
        desired = _round_up(-(-srows // min_steps), pack)
        s_blk = min(target_rows, desired)
        if s_blk >= srows:
            s_blk = srows                            # full dim is always legal
        grid = (N, pl.cdiv(srows, s_blk))
        out = pl.pallas_call(
            _conv1x1_kernel,
            out_shape=jax.ShapeDtypeStruct((N, srows, lane), x_nchw.dtype),
            grid=grid,
            in_specs=[
                pl.BlockSpec((None, C, s_blk, lane), lambda n, s: (n, 0, s, 0)),
                pl.BlockSpec(memory_space=pltpu.MemorySpace.SMEM),  # weight (3,)
                pl.BlockSpec(memory_space=pltpu.MemorySpace.SMEM),  # bias (1,)
            ],
            out_specs=pl.BlockSpec((None, s_blk, lane), lambda n, s: (n, s, 0)),
            compiler_params=compiler_params,
        )(x4, w_vec, b_vec)
        return out.reshape(N, 1, H, W)

    # ---- Ragged path (spatial not a multiple of 128): no jnp.pad.
    # Block only the lane axis of the 3-D view; Pallas boundary masking
    # handles the tail (input over-read clamped, output store masked).
    tile_L = min(_round_up(min(block_elems, spatial), 128),
                 _round_up(-(-spatial // min_steps), 128))
    tile_L = max(128, tile_L)
    grid = (N, pl.cdiv(spatial, tile_L))
    out = pl.pallas_call(
        _conv1x1_kernel,
        out_shape=jax.ShapeDtypeStruct((N, 1, spatial), x_nchw.dtype),
        grid=grid,
        in_specs=[
            pl.BlockSpec((None, C, tile_L), lambda n, s: (n, 0, s)),
            pl.BlockSpec(memory_space=pltpu.MemorySpace.SMEM),
            pl.BlockSpec(memory_space=pltpu.MemorySpace.SMEM),
        ],
        out_specs=pl.BlockSpec((None, 1, tile_L), lambda n, s: (n, 0, s)),
        compiler_params=compiler_params,
    )(x3, w_vec, b_vec)
    return out.reshape(N, 1, H, W)


def _reference(x, weight, bias):
    C = x.shape[1]
    return (jnp.einsum("nchw,oc->nohw", x.astype(jnp.float32),
                       weight.reshape(1, C).astype(jnp.float32))
            + bias.reshape(1, 1, 1, 1).astype(jnp.float32)).astype(x.dtype)


if __name__ == "__main__":
    key = jax.random.PRNGKey(0)
    kx, kw, kb, kx2 = jax.random.split(key, 4)

    N, C = 2, 3
    # Deterministic parameter init (kaiming-uniform-like scale, fan_in=3).
    bound = 1.0 / jnp.sqrt(3.0)
    weight = jax.random.uniform(kw, (1, C, 1, 1), jnp.float32, -bound, bound)
    bias = jax.random.uniform(kb, (1,), jnp.float32, -bound, bound)

    # Case 1: dense path (H*W multiple of 128).
    H, W = 16, 16
    x = jax.random.normal(kx, (N, C, H, W), dtype=jnp.float32)
    out = jax.block_until_ready(qrc_unet_forward(x, weight, bias))
    ref = _reference(x, weight, bias)
    assert out.shape == (N, 1, H, W)
    assert jnp.allclose(out, ref, atol=1e-5, rtol=1e-5)

    # Case 2: ragged path (H*W not a multiple of 128) — no jnp.pad, masked tail.
    H2, W2 = 7, 9
    x2 = jax.random.normal(kx2, (N, C, H2, W2), dtype=jnp.float32)
    out2 = jax.block_until_ready(qrc_unet_forward(x2, weight, bias))
    ref2 = _reference(x2, weight, bias)
    assert out2.shape == (N, 1, H2, W2)
    assert jnp.allclose(out2, ref2, atol=1e-5, rtol=1e-5)

    print("KERNEL_OK")
</pallas_src>

<mosaic_0001>
module attributes {stable_mosaic.version = 11 : i64} {
  func.func @_conv1x1_kernel(%arg0: i32, %arg1: i32, %arg2: memref<1x3x1x256xf32, #tpu.memory_space<vmem>>, %arg3: memref<3xf32, #tpu.memory_space<smem>>, %arg4: memref<1xf32, #tpu.memory_space<smem>>, %arg5: memref<1x1x256xf32, #tpu.memory_space<vmem>>) attributes {dimension_semantics = [#tpu.dimension_semantics<parallel>, #tpu.dimension_semantics<parallel>], iteration_bounds = array<i64: 2, 1>, scalar_prefetch = 0 : i64, scratch_operands = 0 : i64, tpu.core_type = #tpu.core_type<tc>, window_params = [{transform_indices = @transform_0, window_bounds = array<i64: 1, 3, 1, 256>}, {transform_indices = @transform_1, window_bounds = array<i64: 3>}, {transform_indices = @transform_2, window_bounds = array<i64: 1>}, {transform_indices = @transform_3, window_bounds = array<i64: 1, 1, 256>}]} {
    %c0 = arith.constant 0 : index
    %c0_0 = arith.constant 0 : index
    %c0_1 = arith.constant 0 : index
    %c0_2 = arith.constant 0 : index
    %0 = vector.load %arg2[%c0, %c0_0, %c0_1, %c0_2] : memref<1x3x1x256xf32, #tpu.memory_space<vmem>>, vector<1x3x1x256xf32>
    %1 = vector.shape_cast %0 : vector<1x3x1x256xf32> to vector<3x1x256xf32>
    %c0_3 = arith.constant 0 : index
    %2 = memref.load %arg3[%c0_3] : memref<3xf32, #tpu.memory_space<smem>>
    %3 = vector.extract_strided_slice %1 {offsets = [0, 0, 0], sizes = [1, 1, 256], strides = [1, 1, 1]} : vector<3x1x256xf32> to vector<1x1x256xf32>
    %4 = vector.shape_cast %3 : vector<1x1x256xf32> to vector<1x256xf32>
    %5 = vector.broadcast %2 : f32 to vector<1x256xf32>
    %6 = arith.mulf %5, %4 : vector<1x256xf32>
    %c1 = arith.constant 1 : index
    %7 = memref.load %arg3[%c1] : memref<3xf32, #tpu.memory_space<smem>>
    %8 = vector.extract_strided_slice %1 {offsets = [1, 0, 0], sizes = [1, 1, 256], strides = [1, 1, 1]} : vector<3x1x256xf32> to vector<1x1x256xf32>
    %9 = vector.shape_cast %8 : vector<1x1x256xf32> to vector<1x256xf32>
    %10 = vector.broadcast %7 : f32 to vector<1x256xf32>
    %11 = arith.mulf %10, %9 : vector<1x256xf32>
    %12 = arith.addf %6, %11 : vector<1x256xf32>
    %c2 = arith.constant 2 : index
    %13 = memref.load %arg3[%c2] : memref<3xf32, #tpu.memory_space<smem>>
    %14 = vector.extract_strided_slice %1 {offsets = [2, 0, 0], sizes = [1, 1, 256], strides = [1, 1, 1]} : vector<3x1x256xf32> to vector<1x1x256xf32>
    %15 = vector.shape_cast %14 : vector<1x1x256xf32> to vector<1x256xf32>
    %16 = vector.broadcast %13 : f32 to vector<1x256xf32>
    %17 = arith.mulf %16, %15 : vector<1x256xf32>
    %18 = arith.addf %12, %17 : vector<1x256xf32>
    %c0_4 = arith.constant 0 : index
    %19 = memref.load %arg4[%c0_4] : memref<1xf32, #tpu.memory_space<smem>>
    %20 = vector.broadcast %19 : f32 to vector<1x256xf32>
    %21 = arith.addf %18, %20 : vector<1x256xf32>
    %c0_5 = arith.constant 0 : index
    %c0_6 = arith.constant 0 : index
    %c0_7 = arith.constant 0 : index
    %22 = vector.load %arg5[%c0_5, %c0_6, %c0_7] : memref<1x1x256xf32, #tpu.memory_space<vmem>>, vector<1x1x256xf32>
    %23 = vector.shape_cast %22 : vector<1x1x256xf32> to vector<1x256xf32>
    %24 = vector.shape_cast %21 : vector<1x256xf32> to vector<1x1x256xf32>
    tpu.vector_store %arg5[%c0_5, %c0_6, %c0_7], %24 {strides = array<i32>} : memref<1x1x256xf32, #tpu.memory_space<vmem>>, vector<1x1x256xf32>,
    return
  }
  func.func @transform_0(%arg0: i32, %arg1: i32) -> (i32, i32, i32, i32) {
    %c0_i32 = arith.constant 0 : i32
    %c0_i32_0 = arith.constant 0 : i32
    %c0_i32_1 = arith.constant 0 : i32
    return %arg0, %c0_i32, %arg1, %c0_i32_0 : i32, i32, i32, i32
  }
  func.func @transform_1(%arg0: i32, %arg1: i32) -> i32 {
    %c0_i32 = arith.constant 0 : i32
    %c0_i32_0 = arith.constant 0 : i32
    return %c0_i32 : i32
  }
  func.func @transform_2(%arg0: i32, %arg1: i32) -> i32 {
    %c0_i32 = arith.constant 0 : i32
    %c0_i32_0 = arith.constant 0 : i32
    return %c0_i32 : i32
  }
  func.func @transform_3(%arg0: i32, %arg1: i32) -> (i32, i32, i32) {
    %c0_i32 = arith.constant 0 : i32
    %c0_i32_0 = arith.constant 0 : i32
    return %arg0, %arg1, %c0_i32 : i32, i32, i32
  }
}

</mosaic_0001>

<llo_original>
// kernel: tpu_custom_call.1
$region0: #{tpu_custom_call.1}
  #allocation0 [shape = 'u32[]', space=smem, size = 0x4, offset = 0x4, fixed_abs, tag = 'smem constant byte address 0x4 - core index']
  #allocation1 [shape = 'u32[144,128]{1,0:T(1,128)}', space=vmem, size = 0x12000, scoped, tag = 'internal scratch']
  #allocation2 [shape = 'f32[1]{0:T(128)S(6)}', space=smem, size = 0x200, scoped, tag = 'scoped memory for tpu_custom_call.1']
  %s0 = inlined_call_operand.hbm [shape: f32[2,3,1,256], index: 0, kind: input, shape index: {}]
  %s1 = inlined_call_operand.vmem [shape: f32[3], index: 1, kind: input, shape index: {}]
  %s2 = inlined_call_operand.<no memory space> [shape: f32[1], index: 2, kind: input, shape index: {}]
  %s3 = inlined_call_operand.hbm [shape: f32[2,1,256], index: 3, kind: output, shape index: {}]
  %s4 = sld [smem:[#allocation0]]
  $region53: #{tpu_custom_call.1} parent=0
    _
  %s6 = ssub.s32 1, %s4
  %s7 = scalar_select 0, %s6, %s4
  %8 = sst [smem:[#allocation2]] %s2
  $region1: #{tpu_custom_call.1} parent=0
    #allocation3 [shape = 'u8[6144]{0}', space=vmem, size = 0x1800, scoped, tag = 'input window, operand 0']
    #allocation4 [shape = 's32[2]{0}', space=sflag, size = 0x8, scoped, tag = 'scoped memory for tpu_custom_call.1']
    #allocation5 [shape = 's32[2]{0}', space=sflag, size = 0x8, scoped, tag = 'scoped memory for tpu_custom_call.1']
    #allocation6 [shape = 's32[2]{0}', space=sflag, size = 0x8, scoped, tag = 'scoped memory for tpu_custom_call.1']
    #allocation7 [shape = 'u8[512]{0}', space=smem, size = 0x200, scoped, tag = 'input window, operand 1, single buffered']
    #allocation8 [shape = 'u8[2048]{0}', space=vmem, size = 0x800, scoped, tag = 'output window, operand 0']
    %9 = vsyncpa [#allocation4], 0
    %s10 = scalar_lea.sflag [#allocation4], 1
    %11 = vsyncpa %s10, 0
    %12 = vsyncpa [#allocation6], 0
    %13 = vsyncpa [#allocation5], 0
    %s14 = scalar_lea.sflag [#allocation5], 1
    %15 = vsyncpa %s14, 0
    loop: start=0, step=1, limit=4
    $region2: #{tpu_custom_call.1} parent=1 // loop_pre_header
      _
    $region3: #{tpu_custom_call.1} parent=1 // loop_header
      %s17 = sphi 0, %s21
      %p18 = scmp.ge.s32.totalorder %s17, 4
      %s24 = sphi 0, %s36
      %s25 = sphi 0, %s32
      %s26 = sphi 0, %s24
      %s27 = sphi 0, %s25
      %s28 = sphi 0, %s26
      %s29 = sphi 0, %s27
      %s41 = sphi 0, %s43
      %s44 = sphi 0, %s41
      %s45 = sphi 0, %s44
      %s61 = sphi 0, %s45
      %s65 = sphi 0, %s65
      %s67 = sphi 0, %s65
      %s68 = sphi 0, %s67
      %s82 = sphi 0, %s68
      %s86 = sphi 0, %s86
      %s88 = sphi 0, %s86
      %s89 = sphi 0, %s88
      %s103 = sphi 0, %s89
      %s111 = sphi 0, %s113
      %s114 = sphi 0, %s111
      %s115 = sphi 0, %s114
      %s131 = sphi 0, %s115
    $region4: #{tpu_custom_call.1} parent=1 // loop_header_branch
      %20 = sbr.rel (%p18) target = $region8
    $region5: #{tpu_custom_call.1} parent=1 // loop_body
      %s22 = ssub.s32 %s17, 1
      %s23 = ssub.s32 %s17, 2
      %s30 = sadd.s32 1, %s25
      %p31 = scmp.ge.s32.totalorder %s30, 1
      %s32 = scalar_select %p31, 0, %s30
      %s33 = sadd.s32 1, %s24
      %s34 = scalar_select %p31, %s33, %s24
      %p35 = scmp.ge.s32.totalorder %s34, 2
      %s36 = scalar_select %p35, 0, %s34
      %s37 = ssub.s32 %s24, %s36
      %s38 = ssub.s32 %s25, %s32
      %s39 = sor.u32 %s37, %s38
      %p40 = scmp.eq.s32.totalorder %s39, 0
      %s42 = sadd.s32 %s41, 1
      %s43 = scalar_select %p40, %s41, %s42
      %p46 = pneg %p40
      %p47 = scmp.eq.s32.totalorder %s17, 1
      %p48 = por %p46, %p47
      %p49 = scmp.ne.s32.totalorder %s41, %s44
      %p50 = scmp.eq.s32.totalorder %s17, 0
      %p51 = por %p49, %p50
      %p52 = scmp.ne.s32.totalorder %s41, %s44
      %p53 = scmp.eq.s32.totalorder %s22, 1
      %p54 = por %p52, %p53
      %p55 = scmp.ne.s32.totalorder %s44, %s45
      %p56 = scmp.eq.s32.totalorder %s22, 0
      %p57 = por %p55, %p56
      %p58 = scmp.ne.s32.totalorder %s44, %s45
      %p59 = scmp.eq.s32.totalorder %s23, 1
      %p60 = por %p58, %p59
      %p62 = scmp.ne.s32.totalorder %s45, %s61
      %p63 = scmp.eq.s32.totalorder %s23, 0
      %p64 = por %p62, %p63
      %s66 = sadd.s32 %s65, 1
      %p69 = scmp.eq.s32.totalorder %s17, 1
      %p70 = scmp.ne.s32.totalorder %s65, %s67
      %p71 = scmp.eq.s32.totalorder %s17, 0
      %p72 = por %p70, %p71
      %p73 = scmp.ne.s32.totalorder %s65, %s67
      %p74 = scmp.eq.s32.totalorder %s22, 1
      %p75 = por %p73, %p74
      %p76 = scmp.ne.s32.totalorder %s67, %s68
      %p77 = scmp.eq.s32.totalorder %s22, 0
      %p78 = por %p76, %p77
      %p79 = scmp.ne.s32.totalorder %s67, %s68
      %p80 = scmp.eq.s32.totalorder %s23, 1
      %p81 = por %p79, %p80
      %p83 = scmp.ne.s32.totalorder %s68, %s82
      %p84 = scmp.eq.s32.totalorder %s23, 0
      %p85 = por %p83, %p84
      %s87 = sadd.s32 %s86, 1
      %p90 = scmp.eq.s32.totalorder %s17, 1
      %p91 = scmp.ne.s32.totalorder %s86, %s88
      %p92 = scmp.eq.s32.totalorder %s17, 0
      %p93 = por %p91, %p92
      %p94 = scmp.ne.s32.totalorder %s86, %s88
      %p95 = scmp.eq.s32.totalorder %s22, 1
      %p96 = por %p94, %p95
      %p97 = scmp.ne.s32.totalorder %s88, %s89
      %p98 = scmp.eq.s32.totalorder %s22, 0
      %p99 = por %p97, %p98
      %p100 = scmp.ne.s32.totalorder %s88, %s89
      %p101 = scmp.eq.s32.totalorder %s23, 1
      %p102 = por %p100, %p101
      %p104 = scmp.ne.s32.totalorder %s89, %s103
      %p105 = scmp.eq.s32.totalorder %s23, 0
      %p106 = por %p104, %p105
      %s107 = ssub.s32 %s24, %s36
      %s108 = ssub.s32 %s25, %s32
      %s109 = sor.u32 %s107, %s108
      %p110 = scmp.eq.s32.totalorder %s109, 0
      %s112 = sadd.s32 %s111, 1
      %s113 = scalar_select %p110, %s111, %s112
      %p116 = pneg %p110
      %p117 = scmp.eq.s32.totalorder %s17, 1
      %p118 = por %p116, %p117
      %p119 = scmp.ne.s32.totalorder %s111, %s114
      %p120 = scmp.eq.s32.totalorder %s17, 0
      %p121 = por %p119, %p120
      %p122 = scmp.ne.s32.totalorder %s111, %s114
      %p123 = scmp.eq.s32.totalorder %s22, 1
      %p124 = por %p122, %p123
      %p125 = scmp.ne.s32.totalorder %s114, %s115
      %p126 = scmp.eq.s32.totalorder %s22, 0
      %p127 = por %p125, %p126
      %p128 = scmp.ne.s32.totalorder %s114, %s115
      %p129 = scmp.eq.s32.totalorder %s23, 1
      %p130 = por %p128, %p129
      %p132 = scmp.ne.s32.totalorder %s115, %s131
      %p133 = scmp.eq.s32.totalorder %s23, 0
      %p134 = por %p132, %p133
      %p135 = scmp.le.s32.totalorder 1, %s17
      %p136 = scmp.lt.s32.totalorder %s17, 3
      %p137 = pnand %p135, %p136
      %p138 = pneg %p137
      // Predicated region
      $region9: #{tpu_custom_call.1} parent=5 // pred_check
        _
      $region10: #{tpu_custom_call.1} parent=5 // pred_check_branch
        %140 = sbr.rel (%p137) target = $region12
      $region11: #{tpu_custom_call.1} parent=5 // pred_region
        %s141 = ssub.s32 %s17, 1
        // Predicated region
        $region13: #{tpu_custom_call.1} parent=11 // pred_check
          %p142 = pneg %p78
        $region14: #{tpu_custom_call.1} parent=11 // pred_check_branch
          %144 = sbr.rel (%p142) target = $region16
        $region15: #{tpu_custom_call.1} parent=11 // pred_region
          %s146 = ssub.s32 16, 16
          %147 = vsyncadd [#allocation6], %s146
          %s149 = sshll.u32 %s1, 4
          %s150 = int_to_ptr.vmem [resolvable:$true] %s149
          %152 = dma.vmem_to_smem %s150, 16, [#allocation7], [#allocation6]
        $region16: #{tpu_custom_call.1} parent=11 // pred_fallthru
          _
        // Predicated region
        $region17: #{tpu_custom_call.1} parent=11 // pred_check
          %p153 = pneg %p99
        $region18: #{tpu_custom_call.1} parent=11 // pred_check_branch
          %155 = sbr.rel (%p153) target = $region20
        $region19: #{tpu_custom_call.1} parent=11 // pred_region
          _
        $region20: #{tpu_custom_call.1} parent=11 // pred_fallthru
          _
      $region12: #{tpu_custom_call.1} parent=5 // pred_fallthru
        _
      %p156 = scmp.lt.s32.totalorder %s17, 2
      // Predicated region
      $region21: #{tpu_custom_call.1} parent=5 // pred_check
        %p157 = pneg %p156
      $region22: #{tpu_custom_call.1} parent=5 // pred_check_branch
        %159 = sbr.rel (%p157) target = $region24
      $region23: #{tpu_custom_call.1} parent=5 // pred_region
        // Predicated region
        $region25: #{tpu_custom_call.1} parent=23 // pred_check
          %p160 = pneg %p51
        $region26: #{tpu_custom_call.1} parent=23 // pred_check_branch
          %162 = sbr.rel (%p160) target = $region28
        $region27: #{tpu_custom_call.1} parent=23 // pred_region
          %s163 = sand.u32 %s41, 1
          %s164 = scalar_lea.sflag [#allocation4], %s163
          %s165 = sand.u32 %s41, 1
          %s166 = smul.addr %s165, 6
          %s167 = scalar_lea.vmem [#allocation3], %s166
          %s169 = ssub.s32 96, 96
          %170 = vsyncadd %s164, %s169
          %s171 = smul.addr %s25, 2
          %s172 = smul.addr %s24, 6
          %s173 = sadd.s32 %s171, %s172
          %s174 = smul.addr %s173, 16
          %s175 = scalar_lea.hbm %s0, %s174
          %s176 = sshll.u32 %s167, 4
          %s177 = int_to_ptr.vmem [resolvable:$true] %s176
          %182 = dma.hbm_to_vmem [thread:$0]  %s175, 96, %s177, %s164, 32, 32, 2
        $region28: #{tpu_custom_call.1} parent=23 // pred_fallthru
          _
      $region24: #{tpu_custom_call.1} parent=5 // pred_fallthru
        _
      %p183 = scmp.le.s32.totalorder 1, %s17
      %p184 = scmp.lt.s32.totalorder %s17, 3
      %p185 = pnand %p183, %p184
      %p186 = pneg %p185
      // Predicated region
      $region29: #{tpu_custom_call.1} parent=5 // pred_check
        _
      $region30: #{tpu_custom_call.1} parent=5 // pred_check_branch
        %188 = sbr.rel (%p185) target = $region32
      $region31: #{tpu_custom_call.1} parent=5 // pred_region
        %s189 = ssub.s32 %s17, 1
        %s190 = sand.u32 %s44, 1
        %s191 = scalar_lea.sflag [#allocation4], %s190
        %s192 = sand.u32 %s44, 1
        %s193 = smul.addr %s192, 6
        %s194 = scalar_lea.vmem [#allocation3], %s193
        // Predicated region
        $region33: #{tpu_custom_call.1} parent=31 // pred_check
          %p195 = pneg %p57
        $region34: #{tpu_custom_call.1} parent=31 // pred_check_branch
          %197 = sbr.rel (%p195) target = $region36
        $region35: #{tpu_custom_call.1} parent=31 // pred_region
          %198 = dma.done %s191, 96
        $region36: #{tpu_custom_call.1} parent=31 // pred_fallthru
          _
        // Predicated region
        $region37: #{tpu_custom_call.1} parent=31 // pred_check
          %p199 = pneg %p78
        $region38: #{tpu_custom_call.1} parent=31 // pred_check_branch
          %201 = sbr.rel (%p199) target = $region40
        $region39: #{tpu_custom_call.1} parent=31 // pred_region
          %202 = dma.done [#allocation6], 16
        $region40: #{tpu_custom_call.1} parent=31 // pred_fallthru
          _
        %203 = sfence
        %s204 = sand.u32 %s44, 1
        %s205 = scalar_lea.sflag [#allocation4], %s204
        %s206 = sand.u32 %s44, 1
        %s207 = smul.addr %s206, 6
        %s208 = scalar_lea.vmem [#allocation3], %s207
        %p209 = pneg %p57
        %p210 = pneg %p54
        %p211 = pneg %p78
        %p212 = pneg %p75
        %p213 = pneg %p99
        %p214 = pneg %p96
        %p215 = pneg %p127
        %p216 = pneg %p124
        %s217 = sand.u32 %s114, 1
        %s218 = scalar_lea.sflag [#allocation5], %s217
        %s219 = sand.u32 %s114, 1
        %s220 = smul.addr %s219, 2
        %s221 = scalar_lea.vmem [#allocation8], %s220
        %v222 = vld [vmem:[%s194] sm:$0x3]
        %v223 = vld [vmem:[%s194 + $0x2] sm:$0x3]
        %v224 = vld [vmem:[%s194 + $0x4] sm:$0x3]
        %s225 = sld [smem:[#allocation7]]
        %v226 = vstv %s225
        %v227 = vmul.f32 %v226, %v222
        %s228 = sld [smem:[#allocation7 + $0x1]]
        %v229 = vstv %s228
        %v230 = vmul.f32 %v229, %v223
        %v231 = vadd.f32 %v227, %v230
        %s232 = sld [smem:[#allocation7 + $0x2]]
        %v233 = vstv %s232
        %v234 = vmul.f32 %v233, %v224
        %v235 = vadd.f32 %v231, %v234
        %s236 = sld [smem:[#allocation2]]
        %v237 = vstv %s236
        %v238 = vadd.f32 %v235, %v237
        %v239 = vlaneseq
        %vm240 = vcmp.ge.s32.totalorder %v239, 0
        %vm241 = vcmp.lt.s32.totalorder %v239, 256
        %vm242 = vmand %vm240, %vm241
        %243 = vst.msk [vmem:[%s221] sm:$0x3] %vm242, %v238
        %s244 = sand.u32 %s114, 1
        %s245 = scalar_lea.sflag [#allocation5], %s244
        %s246 = sand.u32 %s114, 1
        %s247 = smul.addr %s246, 2
        %s248 = scalar_lea.vmem [#allocation8], %s247
        // Predicated region
        $region41: #{tpu_custom_call.1} parent=31 // pred_check
          %p249 = pneg %p124
        $region42: #{tpu_custom_call.1} parent=31 // pred_check_branch
          %251 = sbr.rel (%p249) target = $region44
        $region43: #{tpu_custom_call.1} parent=31 // pred_region
          %s253 = ssub.s32 32, 32
          %254 = vsyncadd %s245, %s253
          %s255 = smul.addr %s27, 2
          %s256 = smul.addr %s26, 2
          %s257 = sadd.s32 %s255, %s256
          %s258 = smul.addr %s257, 16
          %s259 = scalar_lea.hbm %s3, %s258
          %s261 = sshll.u32 %s248, 4
          %s262 = int_to_ptr.vmem [resolvable:$true] %s261
          %264 = dma.vmem_to_hbm [thread:$0]  %s262, 32, %s259, %s245
        $region44: #{tpu_custom_call.1} parent=31 // pred_fallthru
          _
      $region32: #{tpu_custom_call.1} parent=5 // pred_fallthru
        _
      %p265 = scmp.le.s32.totalorder 2, %s17
      // Predicated region
      $region45: #{tpu_custom_call.1} parent=5 // pred_check
        %p266 = pneg %p265
      $region46: #{tpu_custom_call.1} parent=5 // pred_check_branch
        %268 = sbr.rel (%p266) target = $region48
      $region47: #{tpu_custom_call.1} parent=5 // pred_region
        %s269 = ssub.s32 %s17, 2
        // Predicated region
        $region49: #{tpu_custom_call.1} parent=47 // pred_check
          %p270 = pneg %p130
        $region50: #{tpu_custom_call.1} parent=47 // pred_check_branch
          %272 = sbr.rel (%p270) target = $region52
        $region51: #{tpu_custom_call.1} parent=47 // pred_region
          %s273 = sand.u32 %s115, 1
          %s274 = scalar_lea.sflag [#allocation5], %s273
          %s275 = sand.u32 %s115, 1
          %s276 = smul.addr %s275, 2
          %s277 = scalar_lea.vmem [#allocation8], %s276
          %278 = dma.done %s274, 32
        $region52: #{tpu_custom_call.1} parent=47 // pred_fallthru
          _
      $region48: #{tpu_custom_call.1} parent=5 // pred_fallthru
        _
    $region6: #{tpu_custom_call.1} parent=1 // loop_footer
      %s21 = sadd.s32 1, %s17
    $region7: #{tpu_custom_call.1} parent=1 // loop_footer_branch
      %16 = sbr.rel target = $region3
    $region8: #{tpu_custom_call.1} parent=1 // loop_exit
      _
    %279 = vsyncpa [#allocation4], 1
    %s280 = scalar_lea.sflag [#allocation4], 1
    %281 = vsyncpa %s280, 1
    %282 = vsyncpa [#allocation5], 1
    %s283 = scalar_lea.sflag [#allocation5], 1
    %284 = vsyncpa %s283, 1
    %285 = vsyncpa [#allocation6], 1
    %s286 = scalar_lea.sflag [#allocation6], 1
    %287 = vsyncpa %s286, 1

</llo_original>
